<compile_context>
chip_gen: v5e
topology: v5e:2x2
jax: 0.10.0
libtpu: 0.0.40
codegen_flags: <defaults>
</compile_context>

<pallas_src>
import functools

import jax
import jax.numpy as jnp
from jax.experimental import pallas as pl
from jax.experimental.pallas import tpu as pltpu


def _qco_kernel(x_ref, out_ref, quant_ref, co_ref, *, H, W, L):
    # x_ref    : (N, 1, H*W)     input, spatial flattened onto lanes
    # out_ref  : (N, 3, L*L)     final stacked output (q_h, q_w, normalized sta)
    # quant_ref: (N, L, H*W)     soft-quantization map (lane-dense)
    # co_ref   : (N, L, L, H*W)  co-occurrence, flattened over (H, W)
    N = x_ref.shape[0]
    HW = x_ref.shape[-1]
    sigma = 2.0 / L                                     # == 1 / (level_num / 2)
    inv_sigma_sq = 1.0 / (sigma * sigma)

    x = x_ref[...]                                      # (N, 1, HW)

    # --- q levels fused into the kernel (x is fully VMEM resident) ----------
    xmin = jnp.min(x)
    xmax = jnp.max(x)
    step = (xmax - xmin) / (L - 1)                      # linspace step

    lvl = jax.lax.broadcasted_iota(jnp.int32, (N, L, HW), 1).astype(jnp.float32)
    diff = x - (xmin + lvl * step)                      # (N, L, HW)
    quant = jnp.exp(-(diff * diff) * inv_sigma_sq)      # EUP, lane-dense
    quant_ref[...] = quant                              # dense store

    # --- shifted "right" neighbour built in registers ------------------------
    # right[n, j, h*W + w] = quant_pad[n, j, h+1, w+1]
    #   == quant[n, j, (h+1)*W + (w+1)]  when h < H-1 and w < W-1, else 0.
    # Flat lane rotation by (W + 1) plus a last-row / last-column mask; the
    # rotation's wrap-around only lands on masked positions, so it is harmless.
    rolled = pltpu.roll(quant, shift=HW - (W + 1), axis=2)
    pos = jax.lax.broadcasted_iota(jnp.int32, (N, L, HW), 2).astype(jnp.float32)
    row = jnp.floor((pos + 0.5) * (1.0 / W))            # h = pos // W (exact)
    col = pos - row * W                                 # w = pos %  W (exact)
    mask = (row < H - 1) & (col < W - 1)
    right = jnp.where(mask, rolled, 0.0)                # (N, L, HW), in registers

    # --- co-occurrence + statistics ------------------------------------------
    # co[n, i, j, p] = quant[n, i, p] * right[n, j, p]
    # TODO(synk): for larger H*W, compute/store co per-i slice (or tile its HW
    # axis in >=512-lane blocks on a grid axis) to bound the ~L*L*HW/1024 vreg
    # footprint; at HW=256 the whole product is 16 vregs and one dense store.
    co = quant[:, :, None, :] * right[:, None, :, :]    # (N, L, L, HW)
    co_ref[...] = co

    # sta[n, i, j] = sum_p co[n, i, j, p]  — lane reduce of the product that is
    # already live (no MXU operand transpose needed; XLU slack on all chips).
    sta = jnp.sum(co, axis=-1)                          # (N, L, L)
    # Flatten (i, j) onto lanes: sta_row[n, 0, i*L + j] = sta[n, i, j].
    sta_row = jnp.concatenate([sta[:, i:i + 1, :] for i in range(L)], axis=2)
    denom = jnp.sum(sta_row, axis=-1, keepdims=True)    # (N, 1, 1)

    # --- final (N, 3, L*L) output assembled in the kernel epilogue -----------
    p_out = jax.lax.broadcasted_iota(jnp.int32, (N, 1, L * L), 2).astype(jnp.float32)
    i_idx = jnp.floor((p_out + 0.5) * (1.0 / L))        # i of flat index i*L + j
    j_idx = p_out - i_idx * L                           # j of flat index i*L + j
    out_ref[:, 0:1, :] = xmin + j_idx * step            # q_levels_h: q[j]
    out_ref[:, 1:2, :] = xmin + i_idx * step            # q_levels_w: q[i]
    out_ref[:, 2:3, :] = sta_row / denom                # normalized statistics


def _qco_2d_forward_impl(x, level_num, scale=1):
    """Pallas implementation of QCO_2d.forward. x: (N, H, W) float32."""
    del scale  # stored by the PyTorch module but unused in forward()
    x = x.astype(jnp.float32)
    N, H, W = x.shape
    L = level_num
    HW = H * W

    x_flat = x.reshape(N, 1, HW)                        # spatial on lanes

    kernel = functools.partial(_qco_kernel, H=H, W=W, L=L)
    out, quant_flat, co_flat = pl.pallas_call(
        kernel,
        grid=(1,),
        # TODO(synk): when N or H*W scale up, add a "parallel" grid axis over N
        # (2-TC win on v7x) and tile co's HW axis in multiples of 128 (>=512
        # lanes per tile, unmasked vst); budget per-step VMEM to <=~16-24 MiB
        # on v7x (64 MiB physical) and set vmem_limit_bytes explicitly.
        in_specs=[pl.BlockSpec((N, 1, HW), lambda i: (0, 0, 0))],
        out_specs=(
            pl.BlockSpec((N, 3, L * L), lambda i: (0, 0, 0)),
            pl.BlockSpec((N, L, HW), lambda i: (0, 0, 0)),
            pl.BlockSpec((N, L, L, HW), lambda i: (0, 0, 0, 0)),
        ),
        out_shape=(
            jax.ShapeDtypeStruct((N, 3, L * L), jnp.float32),
            jax.ShapeDtypeStruct((N, L, HW), jnp.float32),
            jax.ShapeDtypeStruct((N, L, L, HW), jnp.float32),
        ),
    )(x_flat)

    # --- layout plumbing back to the PyTorch conventions (jitted glue) -------
    quant_pad = jnp.pad(quant_flat.reshape(N, L, H, W),
                        ((0, 0), (0, 0), (0, 1), (0, 1)))   # (N, L, H+1, W+1)
    co = co_flat.reshape(N, L, L, H, W)                     # metadata-only split
    if N == 1:  # torch .squeeze(0) is a no-op unless dim 0 == 1
        return out[0], quant_pad[0], co[0]
    return out, quant_pad, co


qco_2d_forward = jax.jit(_qco_2d_forward_impl, static_argnums=(1, 2))


def qco_2d_reference(x, level_num):
    """Pure-JAX mirror of the PyTorch forward (for correctness check)."""
    x = x.astype(jnp.float32)
    N, H, W = x.shape
    L = level_num
    xmin, xmax = jnp.min(x), jnp.max(x)
    q = jnp.linspace(xmin, xmax, L).astype(jnp.float32)
    sigma = 1.0 / (L / 2)
    xr = x.reshape(N, 1, H * W)
    quant = jnp.exp(-(xr[..., None] - q.reshape(1, 1, 1, L)) ** 2 / sigma ** 2)
    quant = jnp.transpose(quant.reshape(N, H, W, L), (0, 3, 1, 2))
    quant = jnp.pad(quant, ((0, 0), (0, 0), (0, 1), (0, 1)))
    left = quant[:, :, :H, :W][:, :, None]
    right = quant[:, :, 1:, 1:][:, None]
    co = left * right
    sta = co.sum(axis=(-1, -2))
    sta = sta / sta.sum(axis=(1, 2), keepdims=True)
    qh = jnp.broadcast_to(q.reshape(1, 1, L), (N, L, L))
    qw = jnp.transpose(qh, (0, 2, 1))
    out = jnp.stack([qh, qw, sta], axis=1).reshape(N, 3, L * L)
    if N == 1:
        return out[0], quant[0], co[0]
    return out, quant, co


if __name__ == "__main__":
    key = jax.random.PRNGKey(0)
    N, H, W = 1, 16, 16       # QCO_2d takes a 3-D (N, H, W) input; N must be 1
    level_num = 8
    scale = 1                 # stored by the module, unused in forward

    x = jax.random.normal(key, (N, H, W), dtype=jnp.float32)

    out, quant_pad, co = qco_2d_forward(x, level_num, scale)
    jax.block_until_ready((out, quant_pad, co))

    # sanity: shapes match the PyTorch forward
    assert out.shape == (3, level_num * level_num)
    assert quant_pad.shape == (level_num, H + 1, W + 1)
    assert co.shape == (level_num, level_num, H, W)

    # correctness vs pure-JAX reference
    out_r, quant_r, co_r = qco_2d_reference(x, level_num)
    assert jnp.allclose(out, out_r, atol=1e-3, rtol=1e-3)
    assert jnp.allclose(quant_pad, quant_r, atol=1e-3, rtol=1e-3)
    assert jnp.allclose(co, co_r, atol=1e-3, rtol=1e-3)

    print("KERNEL_OK")
</pallas_src>

<mosaic_0001>
module attributes {stable_mosaic.version = 11 : i64} {
  func.func @_qco_kernel(%arg0: i32, %arg1: memref<1x1x256xf32, #tpu.memory_space<vmem>>, %arg2: memref<1x3x64xf32, #tpu.memory_space<vmem>>, %arg3: memref<1x8x256xf32, #tpu.memory_space<vmem>>, %arg4: memref<1x8x8x256xf32, #tpu.memory_space<vmem>>) attributes {dimension_semantics = [#tpu.dimension_semantics<arbitrary>], iteration_bounds = array<i64: 1>, scalar_prefetch = 0 : i64, scratch_operands = 0 : i64, tpu.core_type = #tpu.core_type<tc>, window_params = [{pipeline_mode = #tpu.pipeline_mode<synchronous>, transform_indices = @transform_0, window_bounds = array<i64: 1, 1, 256>}, {pipeline_mode = #tpu.pipeline_mode<synchronous>, transform_indices = @transform_1, window_bounds = array<i64: 1, 3, 64>}, {pipeline_mode = #tpu.pipeline_mode<synchronous>, transform_indices = @transform_2, window_bounds = array<i64: 1, 8, 256>}, {pipeline_mode = #tpu.pipeline_mode<synchronous>, transform_indices = @transform_3, window_bounds = array<i64: 1, 8, 8, 256>}]} {
    %c0 = arith.constant 0 : index
    %c0_0 = arith.constant 0 : index
    %c0_1 = arith.constant 0 : index
    %0 = vector.load %arg1[%c0, %c0_0, %c0_1] : memref<1x1x256xf32, #tpu.memory_space<vmem>>, vector<1x1x256xf32>
    %1 = vector.shape_cast %0 : vector<1x1x256xf32> to vector<1x1x1x256xf32>
    %cst = arith.constant dense<0x7F800000> : vector<1xf32>
    %2 = vector.multi_reduction <minimumf>, %1, %cst [1, 2, 3] : vector<1x1x1x256xf32> to vector<1xf32>
    %3 = vector.shape_cast %2 : vector<1xf32> to vector<1x1x1x1xf32>
    %4 = vector.extract %3[0, 0, 0, 0] : f32 from vector<1x1x1x1xf32>
    %5 = vector.shape_cast %0 : vector<1x1x256xf32> to vector<1x1x1x256xf32>
    %cst_2 = arith.constant dense<0xFF800000> : vector<1xf32>
    %6 = vector.multi_reduction <maximumf>, %5, %cst_2 [1, 2, 3] : vector<1x1x1x256xf32> to vector<1xf32>
    %7 = vector.shape_cast %6 : vector<1xf32> to vector<1x1x1x1xf32>
    %8 = vector.extract %7[0, 0, 0, 0] : f32 from vector<1x1x1x1xf32>
    %9 = arith.subf %8, %4 : f32
    %cst_3 = arith.constant 7.000000e+00 : f32
    %10 = arith.divf %9, %cst_3 : f32
    %11 = tpu.iota {dimensions = array<i32: 1>} : vector<1x8x256xi32>
    %12 = arith.sitofp %11 : vector<1x8x256xi32> to vector<1x8x256xf32>
    %13 = vector.broadcast %10 : f32 to vector<1x8x256xf32>
    %14 = arith.mulf %12, %13 : vector<1x8x256xf32>
    %15 = vector.broadcast %4 : f32 to vector<1x8x256xf32>
    %16 = arith.addf %15, %14 : vector<1x8x256xf32>
    %17 = vector.broadcast %0 : vector<1x1x256xf32> to vector<1x8x256xf32>
    %18 = arith.subf %17, %16 : vector<1x8x256xf32>
    %19 = arith.mulf %18, %18 : vector<1x8x256xf32>
    %cst_4 = arith.constant 0.000000e+00 : f32
    %20 = vector.broadcast %cst_4 : f32 to vector<1x8x256xf32>
    %21 = arith.subf %20, %19 : vector<1x8x256xf32>
    %cst_5 = arith.constant 1.600000e+01 : f32
    %22 = vector.broadcast %cst_5 : f32 to vector<1x8x256xf32>
    %23 = arith.mulf %21, %22 : vector<1x8x256xf32>
    %24 = math.exp %23 : vector<1x8x256xf32>
    %c0_6 = arith.constant 0 : index
    %c0_7 = arith.constant 0 : index
    %c0_8 = arith.constant 0 : index
    %25 = vector.load %arg3[%c0_6, %c0_7, %c0_8] : memref<1x8x256xf32, #tpu.memory_space<vmem>>, vector<1x8x256xf32>
    tpu.vector_store %arg3[%c0_6, %c0_7, %c0_8], %24 {strides = array<i32>} : memref<1x8x256xf32, #tpu.memory_space<vmem>>, vector<1x8x256xf32>,
    %c239_i32 = arith.constant 239 : i32
    %26 = tpu.dynamic_rotate %24 by %c239_i32 dim 2 : vector<1x8x256xf32>, i32 -> vector<1x8x256xf32>
    %27 = tpu.iota {dimensions = array<i32: 2>} : vector<1x8x256xi32>
    %28 = arith.sitofp %27 : vector<1x8x256xi32> to vector<1x8x256xf32>
    %cst_9 = arith.constant 5.000000e-01 : f32
    %29 = vector.broadcast %cst_9 : f32 to vector<1x8x256xf32>
    %30 = arith.addf %28, %29 : vector<1x8x256xf32>
    %cst_10 = arith.constant 6.250000e-02 : f32
    %31 = vector.broadcast %cst_10 : f32 to vector<1x8x256xf32>
    %32 = arith.mulf %30, %31 : vector<1x8x256xf32>
    %33 = math.floor %32 : vector<1x8x256xf32>
    %cst_11 = arith.constant 1.600000e+01 : f32
    %34 = vector.broadcast %cst_11 : f32 to vector<1x8x256xf32>
    %35 = arith.mulf %33, %34 : vector<1x8x256xf32>
    %36 = arith.subf %28, %35 : vector<1x8x256xf32>
    %cst_12 = arith.constant 1.500000e+01 : f32
    %37 = vector.broadcast %cst_12 : f32 to vector<1x8x256xf32>
    %38 = arith.cmpf olt, %33, %37 : vector<1x8x256xf32>
    %cst_13 = arith.constant 1.500000e+01 : f32
    %39 = vector.broadcast %cst_13 : f32 to vector<1x8x256xf32>
    %40 = arith.cmpf olt, %36, %39 : vector<1x8x256xf32>
    %41 = arith.andi %38, %40 : vector<1x8x256xi1>
    %cst_14 = arith.constant 0.000000e+00 : f32
    %42 = vector.broadcast %cst_14 : f32 to vector<1x8x256xf32>
    %43 = arith.select %41, %26, %42 : vector<1x8x256xi1>, vector<1x8x256xf32>
    %44 = vector.shape_cast %24 : vector<1x8x256xf32> to vector<1x8x1x256xf32>
    %45 = vector.shape_cast %43 : vector<1x8x256xf32> to vector<1x1x8x256xf32>
    %46 = vector.broadcast %44 : vector<1x8x1x256xf32> to vector<1x8x8x256xf32>
    %47 = vector.broadcast %45 : vector<1x1x8x256xf32> to vector<1x8x8x256xf32>
    %48 = arith.mulf %46, %47 : vector<1x8x8x256xf32>
    %c0_15 = arith.constant 0 : index
    %c0_16 = arith.constant 0 : index
    %c0_17 = arith.constant 0 : index
    %c0_18 = arith.constant 0 : index
    %49 = vector.load %arg4[%c0_15, %c0_16, %c0_17, %c0_18] : memref<1x8x8x256xf32, #tpu.memory_space<vmem>>, vector<1x8x8x256xf32>
    tpu.vector_store %arg4[%c0_15, %c0_16, %c0_17, %c0_18], %48 {strides = array<i32>} : memref<1x8x8x256xf32, #tpu.memory_space<vmem>>, vector<1x8x8x256xf32>,
    %cst_19 = arith.constant dense<0.000000e+00> : vector<1x8x8xf32>
    %50 = vector.multi_reduction <add>, %48, %cst_19 [3] : vector<1x8x8x256xf32> to vector<1x8x8xf32>
    %51 = vector.extract_strided_slice %50 {offsets = [0, 0, 0], sizes = [1, 1, 8], strides = [1, 1, 1]} : vector<1x8x8xf32> to vector<1x1x8xf32>
    %52 = vector.extract_strided_slice %50 {offsets = [0, 1, 0], sizes = [1, 1, 8], strides = [1, 1, 1]} : vector<1x8x8xf32> to vector<1x1x8xf32>
    %53 = vector.extract_strided_slice %50 {offsets = [0, 2, 0], sizes = [1, 1, 8], strides = [1, 1, 1]} : vector<1x8x8xf32> to vector<1x1x8xf32>
    %54 = vector.extract_strided_slice %50 {offsets = [0, 3, 0], sizes = [1, 1, 8], strides = [1, 1, 1]} : vector<1x8x8xf32> to vector<1x1x8xf32>
    %55 = vector.extract_strided_slice %50 {offsets = [0, 4, 0], sizes = [1, 1, 8], strides = [1, 1, 1]} : vector<1x8x8xf32> to vector<1x1x8xf32>
    %56 = vector.extract_strided_slice %50 {offsets = [0, 5, 0], sizes = [1, 1, 8], strides = [1, 1, 1]} : vector<1x8x8xf32> to vector<1x1x8xf32>
    %57 = vector.extract_strided_slice %50 {offsets = [0, 6, 0], sizes = [1, 1, 8], strides = [1, 1, 1]} : vector<1x8x8xf32> to vector<1x1x8xf32>
    %58 = vector.extract_strided_slice %50 {offsets = [0, 7, 0], sizes = [1, 1, 8], strides = [1, 1, 1]} : vector<1x8x8xf32> to vector<1x1x8xf32>
    %59 = tpu.concatenate %51, %52, %53, %54, %55, %56, %57, %58 in 2 : vector<1x1x8xf32>, vector<1x1x8xf32>, vector<1x1x8xf32>, vector<1x1x8xf32>, vector<1x1x8xf32>, vector<1x1x8xf32>, vector<1x1x8xf32>, vector<1x1x8xf32> -> vector<1x1x64xf32>
    %cst_20 = arith.constant dense<0.000000e+00> : vector<1x1xf32>
    %60 = vector.multi_reduction <add>, %59, %cst_20 [2] : vector<1x1x64xf32> to vector<1x1xf32>
    %61 = vector.shape_cast %60 : vector<1x1xf32> to vector<1x1x1xf32>
    %62 = tpu.iota {dimensions = array<i32: 2>} : vector<1x1x64xi32>
    %63 = arith.sitofp %62 : vector<1x1x64xi32> to vector<1x1x64xf32>
    %cst_21 = arith.constant 5.000000e-01 : f32
    %64 = vector.broadcast %cst_21 : f32 to vector<1x1x64xf32>
    %65 = arith.addf %63, %64 : vector<1x1x64xf32>
    %cst_22 = arith.constant 1.250000e-01 : f32
    %66 = vector.broadcast %cst_22 : f32 to vector<1x1x64xf32>
    %67 = arith.mulf %65, %66 : vector<1x1x64xf32>
    %68 = math.floor %67 : vector<1x1x64xf32>
    %cst_23 = arith.constant 8.000000e+00 : f32
    %69 = vector.broadcast %cst_23 : f32 to vector<1x1x64xf32>
    %70 = arith.mulf %68, %69 : vector<1x1x64xf32>
    %71 = arith.subf %63, %70 : vector<1x1x64xf32>
    %72 = vector.broadcast %10 : f32 to vector<1x1x64xf32>
    %73 = arith.mulf %71, %72 : vector<1x1x64xf32>
    %74 = vector.broadcast %4 : f32 to vector<1x1x64xf32>
    %75 = arith.addf %74, %73 : vector<1x1x64xf32>
    %c0_24 = arith.constant 0 : index
    %c0_25 = arith.constant 0 : index
    %c0_26 = arith.constant 0 : index
    %76 = vector.load %arg2[%c0_24, %c0_25, %c0_26] : memref<1x3x64xf32, #tpu.memory_space<vmem>>, vector<1x1x64xf32>
    tpu.vector_store %arg2[%c0_24, %c0_25, %c0_26], %75 {strides = array<i32>} : memref<1x3x64xf32, #tpu.memory_space<vmem>>, vector<1x1x64xf32>,
    %77 = vector.broadcast %10 : f32 to vector<1x1x64xf32>
    %78 = arith.mulf %68, %77 : vector<1x1x64xf32>
    %79 = vector.broadcast %4 : f32 to vector<1x1x64xf32>
    %80 = arith.addf %79, %78 : vector<1x1x64xf32>
    %c0_27 = arith.constant 0 : index
    %c1 = arith.constant 1 : index
    %c0_28 = arith.constant 0 : index
    %81 = vector.load %arg2[%c0_27, %c1, %c0_28] : memref<1x3x64xf32, #tpu.memory_space<vmem>>, vector<1x1x64xf32>
    tpu.vector_store %arg2[%c0_27, %c1, %c0_28], %80 {strides = array<i32>} : memref<1x3x64xf32, #tpu.memory_space<vmem>>, vector<1x1x64xf32>,
    %82 = vector.broadcast %61 : vector<1x1x1xf32> to vector<1x1x64xf32>
    %83 = arith.divf %59, %82 : vector<1x1x64xf32>
    %c0_29 = arith.constant 0 : index
    %c2 = arith.constant 2 : index
    %c0_30 = arith.constant 0 : index
    %84 = vector.load %arg2[%c0_29, %c2, %c0_30] : memref<1x3x64xf32, #tpu.memory_space<vmem>>, vector<1x1x64xf32>
    tpu.vector_store %arg2[%c0_29, %c2, %c0_30], %83 {strides = array<i32>} : memref<1x3x64xf32, #tpu.memory_space<vmem>>, vector<1x1x64xf32>,
    return
  }
  func.func @transform_0(%arg0: i32) -> (i32, i32, i32) {
    %c0_i32 = arith.constant 0 : i32
    %c0_i32_0 = arith.constant 0 : i32
    %c0_i32_1 = arith.constant 0 : i32
    %c0_i32_2 = arith.constant 0 : i32
    return %c0_i32, %c0_i32_0, %c0_i32_1 : i32, i32, i32
  }
  func.func @transform_1(%arg0: i32) -> (i32, i32, i32) {
    %c0_i32 = arith.constant 0 : i32
    %c0_i32_0 = arith.constant 0 : i32
    %c0_i32_1 = arith.constant 0 : i32
    %c0_i32_2 = arith.constant 0 : i32
    return %c0_i32, %c0_i32_0, %c0_i32_1 : i32, i32, i32
  }
  func.func @transform_2(%arg0: i32) -> (i32, i32, i32) {
    %c0_i32 = arith.constant 0 : i32
    %c0_i32_0 = arith.constant 0 : i32
    %c0_i32_1 = arith.constant 0 : i32
    %c0_i32_2 = arith.constant 0 : i32
    return %c0_i32, %c0_i32_0, %c0_i32_1 : i32, i32, i32
  }
  func.func @transform_3(%arg0: i32) -> (i32, i32, i32, i32) {
    %c0_i32 = arith.constant 0 : i32
    %c0_i32_0 = arith.constant 0 : i32
    %c0_i32_1 = arith.constant 0 : i32
    %c0_i32_2 = arith.constant 0 : i32
    %c0_i32_3 = arith.constant 0 : i32
    return %c0_i32, %c0_i32_0, %c0_i32_1, %c0_i32_2 : i32, i32, i32, i32
  }
}

</mosaic_0001>

<llo_original>
// kernel: _qco_2d_forward_impl.1
$region0: #{_qco_2d_forward_impl.1}
  #allocation0 [shape = 'u32[]', space=smem, size = 0x4, offset = 0x4, fixed_abs, tag = 'smem constant byte address 0x4 - core index']
  #allocation1 [shape = 'u32[72,128]{1,0:T(1,128)}', space=vmem, size = 0x9000, scoped, tag = 'internal scratch']
  %s0 = inlined_call_operand.vmem [shape: f32[1,1,256], index: 0, kind: input, shape index: {}]
  %s1 = inlined_call_operand.hbm [shape: f32[1,3,64], index: 1, kind: output, shape index: {0}]
  %s2 = inlined_call_operand.vmem [shape: f32[1,8,256], index: 2, kind: output, shape index: {1}]
  %s3 = inlined_call_operand.vmem [shape: f32[1,8,8,256], index: 3, kind: output, shape index: {2}]
  %4 = xla_tuple %s1, %s2, %s3
  %s5 = sld [smem:[#allocation0]]
  $region30: #{_qco_2d_forward_impl.1} parent=0
    _
  %s7 = ssub.s32 1, %s5
  %s8 = scalar_select 0, %s7, %s5
  $region1: #{_qco_2d_forward_impl.1} parent=0
    #allocation2 [shape = 'u8[2048]{0}', space=vmem, size = 0x800, scoped, tag = 'output window, operand 0, single buffered']
    #allocation3 [shape = 's32[1]{0}', space=sflag, size = 0x4, scoped, tag = 'scoped memory for _qco_2d_forward_impl.1']
    %9 = vsyncpa [#allocation3], 0
    // Predicated region
    $region2: #{_qco_2d_forward_impl.1} parent=1 // pred_check
      _
    $region3: #{_qco_2d_forward_impl.1} parent=1 // pred_check_branch
      %11 = sbr.rel (0) target = $region5
    $region4: #{_qco_2d_forward_impl.1} parent=1 // pred_region
      _
    $region5: #{_qco_2d_forward_impl.1} parent=1 // pred_fallthru
      _
    %v12 = vld [vmem:[%s0] sm:$0x3]
    %v14 = vperm.slane %v12, 0
    %v15 = vperm.slane %v12, 1
    %vm18 = vcmask 1040384
    %v19 = vsel %vm18, %v14, inf
    %v20 = vsel %vm18, %v15, inf
    %v21 = vmin.f32 %v19, %v20
    %22 = vmin.xlane.f32.xlu0 %v21
    %v23 = vpop.xlane.xlu0 %22
    %v24 = vrot.slane %v23, 4
    %v25 = vmin.f32 %v23, %v24
    %v26 = vrot.slane %v25, 2
    %v27 = vmin.f32 %v25, %v26
    %v28 = vrot.slane %v27, 1
    %v29 = vmin.f32 %v27, %v28
    %s30 = vtos %v29
    %v31 = vsel %vm18, %v14, -inf
    %v32 = vsel %vm18, %v15, -inf
    %v33 = vmax.f32 %v31, %v32
    %34 = vmax.xlane.f32.xlu0 %v33
    %v35 = vpop.xlane.xlu0 %34
    %v36 = vrot.slane %v35, 4
    %v37 = vmax.f32 %v35, %v36
    %v38 = vrot.slane %v37, 2
    %v39 = vmax.f32 %v37, %v38
    %v40 = vrot.slane %v39, 1
    %v41 = vmax.f32 %v39, %v40
    %s42 = vtos %v41
    %s43 = ssub.f32 %s42, %s30
    %v44 = vrcp.pop 7.0
    %v45 = vmul.f32 7.0, %v44
    %v46 = vsub.f32 1.0, %v45
    %v47 = vmul.f32 %v44, %v46
    %v48 = vadd.f32 %v44, %v47
    %vm49 = vweird.f32 %v44
    %v50 = vsel %vm49, %v44, %v48
    %s51 = vtos %v50
    %s52 = smul.f32 %s43, %s51
    %v53 = vlaneseq
    %v54 = vshrl.u32 %v53, 7
    %v55 = vcvt.s32.f32 %v54
    %v56 = vstv %s52
    %v57 = vmul.f32 %v55, %v56
    %v58 = vstv %s30
    %v59 = vadd.f32 %v58, %v57
    %v60 = vsub.f32 %v14, %v59
    %v61 = vsub.f32 %v15, %v59
    %v62 = vmul.f32 %v60, %v60
    %v63 = vmul.f32 %v61, %v61
    %v64 = vsub.f32 0.0, %v62
    %v65 = vsub.f32 0.0, %v63
    %v66 = vmul.f32 %v64, 16.0
    %v67 = vmul.f32 %v65, 16.0
    %v68 = vmul.f32 %v66, 1.442695
    %v69 = vpow.pop %v68
    %v70 = vmul.f32 %v67, 1.442695
    %v71 = vpow.pop %v70
    %72 = vst [vmem:[%s2] sm:$0xff] %v69
    %73 = vst [vmem:[%s2 + $0x8] sm:$0xff] %v71
    %74 = vrot.lane.b32.xlu0 %v69, 111
    %v75 = vpop.permute.xlu0 %74
    %76 = vrot.lane.b32.xlu0 %v71, 111
    %v77 = vpop.permute.xlu0 %76
    %v78 = vlaneseq
    %v79 = vand.u32 %v78, 127
    %vm80 = vcmp.lt.s32.totalorder %v79, 111
    %v81 = vsel %vm80, %v75, %v77
    %v82 = vsel %vm80, %v77, %v75
    %v83 = vadd.s32 %v79, 128
    %v84 = vcvt.s32.f32 %v79
    %v85 = vcvt.s32.f32 %v83
    %v86 = vadd.f32 %v84, 0.5
    %v87 = vadd.f32 %v85, 0.5
    %v88 = vmul.f32 %v86, 0.0625
    %v89 = vmul.f32 %v87, 0.0625
    %v90 = vfloor.f32 %v88
    %v91 = vfloor.f32 %v89
    %v92 = vmul.f32 %v90, 16.0
    %v93 = vmul.f32 %v91, 16.0
    %v94 = vsub.f32 %v84, %v92
    %v95 = vsub.f32 %v85, %v93
    %vm96 = vcmp.lt.f32.partialorder %v90, 15.0
    %vm97 = vcmp.lt.f32.partialorder %v91, 15.0
    %vm98 = vcmp.lt.f32.partialorder %v94, 15.0
    %vm99 = vcmp.lt.f32.partialorder %v95, 15.0
    %vm100 = vmand %vm96, %vm98
    %vm101 = vmand %vm97, %vm99
    %v102 = vsel %vm100, %v81, 0.0
    %v103 = vsel %vm101, %v82, 0.0
    %v106 = vrot.slane %v71, 7
    %v107 = vsel %vm18, %v69, %v106
    %vm108 = vcmask 1041409
    %v109 = vsel %vm108, %v69, %v106
    %v110 = vrot.slane %v109, 1
    %vm111 = vcmask 1042434
    %v112 = vsel %vm111, %v69, %v106
    %v113 = vrot.slane %v112, 2
    %vm114 = vcmask 1043459
    %v115 = vsel %vm114, %v69, %v106
    %v116 = vrot.slane %v115, 3
    %vm117 = vcmask 1044484
    %v118 = vsel %vm117, %v69, %v106
    %v119 = vrot.slane %v118, 4
    %vm120 = vcmask 1045509
    %v121 = vsel %vm120, %v69, %v106
    %v122 = vrot.slane %v121, 5
    %vm123 = vcmask 1046534
    %v124 = vsel %vm123, %v69, %v106
    %v125 = vrot.slane %v124, 6
    %vm126 = vcmask 1046528
    %v127 = vsel %vm126, %v106, %v69
    %v128 = vrot.slane %v127, 7
    %v129 = vperm.slane %v107, 0
    %v130 = vperm.slane %v107, 1
    %v131 = vperm.slane %v110, 0
    %v132 = vperm.slane %v110, 1
    %v133 = vperm.slane %v113, 0
    %v134 = vperm.slane %v113, 1
    %v135 = vperm.slane %v116, 0
    %v136 = vperm.slane %v116, 1
    %v137 = vperm.slane %v119, 0
    %v138 = vperm.slane %v119, 1
    %v139 = vperm.slane %v122, 0
    %v140 = vperm.slane %v122, 1
    %v141 = vperm.slane %v125, 0
    %v142 = vperm.slane %v125, 1
    %v143 = vperm.slane %v128, 0
    %v144 = vperm.slane %v128, 1
    %v161 = vmul.f32 %v129, %v102
    %v162 = vmul.f32 %v130, %v103
    %v163 = vmul.f32 %v131, %v102
    %v164 = vmul.f32 %v132, %v103
    %v165 = vmul.f32 %v133, %v102
    %v166 = vmul.f32 %v134, %v103
    %v167 = vmul.f32 %v135, %v102
    %v168 = vmul.f32 %v136, %v103
    %v169 = vmul.f32 %v137, %v102
    %v170 = vmul.f32 %v138, %v103
    %v171 = vmul.f32 %v139, %v102
    %v172 = vmul.f32 %v140, %v103
    %v173 = vmul.f32 %v141, %v102
    %v174 = vmul.f32 %v142, %v103
    %v175 = vmul.f32 %v143, %v102
    %v176 = vmul.f32 %v144, %v103
    %177 = vst [vmem:[%s3] sm:$0xff] %v161
    %178 = vst [vmem:[%s3 + $0x8] sm:$0xff] %v162
    %179 = vst [vmem:[%s3 + $0x10] sm:$0xff] %v163
    %180 = vst [vmem:[%s3 + $0x18] sm:$0xff] %v164
    %181 = vst [vmem:[%s3 + $0x20] sm:$0xff] %v165
    %182 = vst [vmem:[%s3 + $0x28] sm:$0xff] %v166
    %183 = vst [vmem:[%s3 + $0x30] sm:$0xff] %v167
    %184 = vst [vmem:[%s3 + $0x38] sm:$0xff] %v168
    %185 = vst [vmem:[%s3 + $0x40] sm:$0xff] %v169
    %186 = vst [vmem:[%s3 + $0x48] sm:$0xff] %v170
    %187 = vst [vmem:[%s3 + $0x50] sm:$0xff] %v171
    %188 = vst [vmem:[%s3 + $0x58] sm:$0xff] %v172
    %189 = vst [vmem:[%s3 + $0x60] sm:$0xff] %v173
    %190 = vst [vmem:[%s3 + $0x68] sm:$0xff] %v174
    %191 = vst [vmem:[%s3 + $0x70] sm:$0xff] %v175
    %192 = vst [vmem:[%s3 + $0x78] sm:$0xff] %v176
    %v193 = vadd.f32 %v161, %v162
    %194 = vadd.xlane.f32.xlu0 %v193
    %v195 = vpop.xlane.xlu0 %194
    %v196 = vadd.f32 %v163, %v164
    %197 = vadd.xlane.f32.xlu0 %v196
    %v198 = vpop.xlane.xlu0 %197
    %v199 = vadd.f32 %v165, %v166
    %200 = vadd.xlane.f32.xlu0 %v199
    %v201 = vpop.xlane.xlu0 %200
    %v202 = vadd.f32 %v167, %v168
    %203 = vadd.xlane.f32.xlu0 %v202
    %v204 = vpop.xlane.xlu0 %203
    %v205 = vadd.f32 %v169, %v170
    %206 = vadd.xlane.f32.xlu0 %v205
    %v207 = vpop.xlane.xlu0 %206
    %v208 = vadd.f32 %v171, %v172
    %209 = vadd.xlane.f32.xlu0 %v208
    %v210 = vpop.xlane.xlu0 %209
    %v211 = vadd.f32 %v173, %v174
    %212 = vadd.xlane.f32.xlu0 %v211
    %v213 = vpop.xlane.xlu0 %212
    %v214 = vadd.f32 %v175, %v176
    %215 = vadd.xlane.f32.xlu0 %v214
    %v216 = vpop.xlane.xlu0 %215
    %v218 = vperm.slane %v195, %v79
    %v221 = vadd.s32 %v79, 4294967288
    %v222 = vperm.slane %v198, %v221
    %v225 = vadd.s32 %v79, 4294967280
    %v226 = vperm.slane %v201, %v225
    %v229 = vadd.s32 %v79, 4294967272
    %v230 = vperm.slane %v204, %v229
    %v233 = vadd.s32 %v79, 4294967264
    %v234 = vperm.slane %v207, %v233
    %v237 = vadd.s32 %v79, 4294967256
    %v238 = vperm.slane %v210, %v237
    %v241 = vadd.s32 %v79, 4294967248
    %v242 = vperm.slane %v213, %v241
    %v245 = vadd.s32 %v79, 4294967240
    %v246 = vperm.slane %v216, %v245
    %vm248 = vcmask 64512
    %v249 = vsel %vm248, %v218, %v222
    %vm250 = vcmask 130048
    %v251 = vsel %vm250, %v249, %v226
    %vm252 = vcmask 195584
    %v253 = vsel %vm252, %v251, %v230
    %vm254 = vcmask 261120
    %v255 = vsel %vm254, %v253, %v234
    %vm256 = vcmask 326656
    %v257 = vsel %vm256, %v255, %v238
    %vm258 = vcmask 392192
    %v259 = vsel %vm258, %v257, %v242
    %vm260 = vcmask 457728
    %v261 = vsel %vm260, %v259, %v246
    %vm262 = vcmask 516096
    %v263 = vsel %vm262, %v261, 0.0
    %264 = vadd.xlane.f32.xlu0 %v263
    %v265 = vpop.xlane.xlu0 %264
    %v266 = vmul.f32 %v86, 0.125
    %v267 = vfloor.f32 %v266
    %v268 = vmul.f32 %v267, 8.0
    %v269 = vsub.f32 %v84, %v268
    %v270 = vmul.f32 %v269, %v56
    %v271 = vadd.f32 %v58, %v270
    %272 = vst.msk [vmem:[#allocation2] sm:$0x1] %vm262, %v271
    %v273 = vmul.f32 %v267, %v56
    %v274 = vadd.f32 %v58, %v273
    %275 = vst.msk [vmem:[#allocation2 + $0x1] sm:$0x1] %vm262, %v274
    %v276 = vrcp.pop %v265
    %v277 = vmul.f32 %v265, %v276
    %v278 = vsub.f32 1.0, %v277
    %v279 = vmul.f32 %v276, %v278
    %v280 = vadd.f32 %v276, %v279
    %vm281 = vweird.f32 %v265
    %vm282 = vweird.f32 %v276
    %vm283 = vmor %vm281, %vm282
    %v284 = vsel %vm283, %v276, %v280
    %v285 = vand.u32 2147483647, %v265
    %vm286 = vcmp.eq.f32.partialorder %v285, 8.507059e+37
    %v287 = vand.u32 %v265, 2147483648
    %v288 = vor.u32 1.1754944e-38, %v287
    %v289 = vsel %vm286, %v288, %v284
    %v290 = vmul.f32 %v261, %v289
    %291 = vst.msk [vmem:[#allocation2 + $0x2] sm:$0x1] %vm262, %v290
    // Predicated region
    $region6: #{_qco_2d_forward_impl.1} parent=1 // pred_check
      _
    $region7: #{_qco_2d_forward_impl.1} parent=1 // pred_check_branch
      %293 = sbr.rel (0) target = $region9
    $region8: #{_qco_2d_forward_impl.1} parent=1 // pred_region
      %295 = vsyncadd [#allocation3], 0
      %s297 = sshll.u32 [#allocation2], 4
      %s298 = int_to_ptr.vmem [resolvable:$true] %s297
      %s299 = sshll.u32 %s1, 4
      %s300 = int_to_ptr.hbm [resolvable:$true] %s299
      %302 = dma.vmem_to_hbm [thread:$0]  %s298, 64, %s300, [#allocation3]
    $region9: #{_qco_2d_forward_impl.1} parent=1 // pred_fallthru
      _
    // Predicated region
    $region10: #{_qco_2d_forward_impl.1} parent=1 // pred_check
      _
    $region11: #{_qco_2d_forward_impl.1} parent=1 // pred_check_branch
      %304 = sbr.rel (0) target = $region13
    $region12: #{_qco_2d_forward_impl.1} parent=1 // pred_region
      _
    $region13: #{_qco_2d_forward_impl.1} parent=1 // pred_fallthru
      _
    // Predicated region
    $region14: #{_qco_2d_forward_impl.1} parent=1 // pred_check
      _
    $region15: #{_qco_2d_forward_impl.1} parent=1 // pred_check_branch
      %306 = sbr.rel (0) target = $region17
    $region16: #{_qco_2d_forward_impl.1} parent=1 // pred_region
      _
    $region17: #{_qco_2d_forward_impl.1} parent=1 // pred_fallthru
      _
    // Predicated region
    $region18: #{_qco_2d_forward_impl.1} parent=1 // pred_check
      _
    $region19: #{_qco_2d_forward_impl.1} parent=1 // pred_check_branch
      %308 = sbr.rel (0) target = $region21
    $region20: #{_qco_2d_forward_impl.1} parent=1 // pred_region
      %310 = dma.done [#allocation3], 64
    $region21: #{_qco_2d_forward_impl.1} parent=1 // pred_fallthru
      _
    // Predicated region
    $region22: #{_qco_2d_forward_impl.1} parent=1 // pred_check
      _
    $region23: #{_qco_2d_forward_impl.1} parent=1 // pred_check_branch
      %312 = sbr.rel (0) target = $region25
    $region24: #{_qco_2d_forward_impl.1} parent=1 // pred_region
      _
    $region25: #{_qco_2d_forward_impl.1} parent=1 // pred_fallthru
      _
    // Predicated region
    $region26: #{_qco_2d_forward_impl.1} parent=1 // pred_check
      _
    $region27: #{_qco_2d_forward_impl.1} parent=1 // pred_check_branch
      %314 = sbr.rel (0) target = $region29
    $region28: #{_qco_2d_forward_impl.1} parent=1 // pred_region
      _
    $region29: #{_qco_2d_forward_impl.1} parent=1 // pred_fallthru
      _
    %315 = vsyncpa [#allocation3], 1

</llo_original>
